<compile_context>
chip_gen: v7x
topology: tpu7x:2x2x1
jax: 0.10.0
libtpu: 0.0.40
codegen_flags: <defaults>
</compile_context>

<pallas_src>
from functools import partial

import jax
import jax.numpy as jnp
from jax.experimental import pallas as pl
from jax.experimental.pallas import tpu as pltpu


def _softplus(x, bf16_exp=False):
    # numerically stable softplus == torch.nn.Softplus(beta=1)
    if bf16_exp:
        # v6e/v7x-only approximation knob: exp/log1p on bf16 (EUP has bf16 there),
        # max(x,0) branch and final add stay f32. Default OFF (v5e-safe, exact-ish).
        t = jnp.log1p(jnp.exp((-jnp.abs(x)).astype(jnp.bfloat16))).astype(jnp.float32)
        return jnp.maximum(x, 0.0) + t
    return jnp.maximum(x, 0.0) + jnp.log1p(jnp.exp(-jnp.abs(x)))


def _mlp_kernel(xc_ref, w1_ref, b1_ref, w2_ref, b2_ref, w3_ref, b3_ref, o_ref,
                *, bf16_softplus_exp=False):
    # Layer 1: Linear(input_dim + context_dim -> H1) + Softplus.
    # Single fused K = Din+Dctx dot; operand cast to the weight (compute) dtype
    # happens here in-kernel so the wrapper doesn't burn an extra HBM pass.
    xc = xc_ref[...].astype(w1_ref.dtype)
    h = jnp.dot(xc, w1_ref[...], preferred_element_type=jnp.float32) + b1_ref[...]
    h = _softplus(h, bf16_softplus_exp)   # f32 softplus path by default (v5e-safe)
    # Dropout(p=0.0) -> identity (eval-mode / p=0 semantics)

    # Layer 2: Linear(H1 -> H2) + Softplus
    h = jnp.dot(h.astype(w2_ref.dtype), w2_ref[...],
                preferred_element_type=jnp.float32) + b2_ref[...]
    h = _softplus(h, bf16_softplus_exp)
    # Dropout(p=0.0) -> identity

    # Output layer: Linear(H2 -> input_dim), no activation. Dout is NOT lane-padded.
    o = jnp.dot(h.astype(w3_ref.dtype), w3_ref[...],
                preferred_element_type=jnp.float32) + b3_ref[...]
    o_ref[...] = o.astype(o_ref.dtype)


def _round_up(n, m):
    return ((n + m - 1) // m) * m


def _pad_to(arr, shape):
    pads = [(0, t - s) for s, t in zip(arr.shape, shape)]
    if all(p == (0, 0) for p in pads):
        return arr
    return jnp.pad(arr, pads)


def prepare_params(params, *, compute_dtype=jnp.bfloat16):
    """Pad hidden dims to multiples of 128 and cast weights ONCE (call outside hot loop).

    Invariant: the zero-padded rows H1..H1p of W2 and H2..H2p of W3 are what keep the
    padded hidden lanes (softplus(0)=log 2) from contaminating the result. Keep them zero.
    """
    w1, b1, w2, b2, w3, b3 = params
    Dio, H1 = w1.shape
    H2 = w2.shape[1]
    Dout = w3.shape[1]
    H1p = _round_up(H1, 128)
    H2p = _round_up(H2, 128)
    wd = w1.dtype if compute_dtype is None else compute_dtype

    w1p = _pad_to(w1, (Dio, H1p)).astype(wd)
    b1p = _pad_to(b1.reshape(1, -1), (1, H1p)).astype(jnp.float32)
    w2p = _pad_to(w2, (H1p, H2p)).astype(wd)
    b2p = _pad_to(b2.reshape(1, -1), (1, H2p)).astype(jnp.float32)
    w3p = _pad_to(w3, (H2p, Dout)).astype(wd)          # output dim left unpadded
    b3p = b3.reshape(1, -1).astype(jnp.float32)
    return (w1p, b1p, w2p, b2p, w3p, b3p)


def conditional_fcnn_forward(x, context, prepared, *, batch_tile=4096,
                             bf16_softplus_exp=False):
    """Pallas-backed equivalent of ConditionalFCNN._conditioned_forward.

    `prepared` comes from prepare_params (weights already padded/cast).
    batch_tile: batch rows per grid step; clamped to the padded batch and split so
                the grid has >=2 steps when the batch allows (v7x megacore).
    """
    w1p, b1p, w2p, b2p, w3p, b3p = prepared
    B, Din = x.shape
    _, Dctx = context.shape
    Dio = Din + Dctx
    assert w1p.shape[0] == Dio
    H1p, H2p = w2p.shape
    Dout = w3p.shape[1]

    sub32 = (jnp.dtype(w1p.dtype).itemsize < 4) or (jnp.dtype(x.dtype).itemsize < 4)
    align = 16 if sub32 else 8   # bf16 packs 2 rows/sublane -> 16-row tiles

    tile = min(batch_tile, _round_up(B, align))
    tile = max(align, _round_up(tile, align))
    # Keep >=2 grid steps when the batch is big enough so the "parallel" batch axis
    # can be sharded across both v7x TensorCores.
    if tile >= B and B > 2 * align:
        tile = min(tile, _round_up((B + 1) // 2, align))
    Bp = _round_up(B, tile)

    # Cheap (32 B/row) wrapper concat so layer 1 is one K=Dio dot on the MXU.
    xc = _pad_to(jnp.concatenate([x, context], axis=-1), (Bp, Dio))

    grid = (Bp // tile,)
    full = lambda shape: pl.BlockSpec(shape, lambda i: (0, 0))  # resident in VMEM

    kernel = partial(_mlp_kernel, bf16_softplus_exp=bf16_softplus_exp)

    out_p = pl.pallas_call(
        kernel,
        out_shape=jax.ShapeDtypeStruct((Bp, Dout), x.dtype),
        grid_spec=pltpu.PrefetchScalarGridSpec(
            num_scalar_prefetch=0,
            grid=grid,
            in_specs=[
                pl.BlockSpec((tile, Dio), lambda i: (i, 0)),   # concat(x, ctx) tile
                full((Dio, H1p)), full((1, H1p)),
                full((H1p, H2p)), full((1, H2p)),
                full((H2p, Dout)), full((1, Dout)),
            ],
            out_specs=pl.BlockSpec((tile, Dout), lambda i: (i, 0)),
        ),
        compiler_params=pltpu.CompilerParams(
            dimension_semantics=("parallel",),
            vmem_limit_bytes=48 * 1024 * 1024,   # headroom under v7x 64 MiB VMEM
        ),
    )(xc, w1p, b1p, w2p, b2p, w3p, b3p)

    return out_p[:B]   # only the batch tail is sliced; no feature-dim slice pass


def init_params(key, input_dim, context_dim, hidden_dims, dtype=jnp.float32):
    """Deterministic init matching the shapes of ConditionalFCNN.__init__
    (PyTorch Linear default: U(-1/sqrt(fan_in), 1/sqrt(fan_in)))."""
    dims_in = [input_dim + context_dim] + list(hidden_dims)
    dims_out = list(hidden_dims) + [input_dim]
    params = []
    for din, dout in zip(dims_in, dims_out):
        key, kw, kb = jax.random.split(key, 3)
        bound = 1.0 / jnp.sqrt(jnp.array(din, dtype))
        w = jax.random.uniform(kw, (din, dout), dtype, -bound, bound)
        b = jax.random.uniform(kb, (1, dout), dtype, -bound, bound)
        params += [w, b]
    return tuple(params)


def reference_forward(x, context, params):
    """Pure-JAX reference for correctness checking."""
    w1, b1, w2, b2, w3, b3 = params
    h = jnp.concatenate([x, context], axis=-1)
    h = _softplus(h @ w1 + b1)
    h = _softplus(h @ w2 + b2)
    return h @ w3 + b3


if __name__ == "__main__":
    # TODO(synk): Dropout with p>0 / training-mode RNG is not implemented (p=0 == identity).
    input_dim = 4
    context_dim = 4
    hidden_dims = (32, 32)
    batch = 200  # non-divisible batch exercises the cdiv + zero-pad path and a 2-step grid

    key = jax.random.PRNGKey(0)
    kx, kc, kp = jax.random.split(key, 3)
    x = jax.random.normal(kx, (batch, input_dim), jnp.float32)
    context = jax.random.normal(kc, (batch, context_dim), jnp.float32)
    params = init_params(kp, input_dim, context_dim, hidden_dims)
    ref = reference_forward(x, context, params)

    # 1) exact f32-operand path (tight tolerance)
    prep_f32 = prepare_params(params, compute_dtype=None)
    out_f32 = jax.block_until_ready(
        conditional_fcnn_forward(x, context, prep_f32, batch_tile=128))
    assert out_f32.shape == (batch, input_dim)
    assert jnp.allclose(out_f32, ref, atol=1e-5, rtol=1e-5), "f32 path mismatch vs reference"

    # 2) default bf16-operand path (f32 accumulation) — looser tolerance expected
    prep_bf16 = prepare_params(params)  # compute_dtype=bfloat16 default
    out_bf16 = jax.block_until_ready(conditional_fcnn_forward(x, context, prep_bf16))
    assert out_bf16.shape == (batch, input_dim)
    assert jnp.allclose(out_bf16, ref, atol=5e-2), "bf16 path mismatch vs reference"

    print("KERNEL_OK")
</pallas_src>

<mosaic_0001>
module attributes {stable_mosaic.version = 11 : i64} {
  func.func @_mlp_kernel(%arg0: i32, %arg1: memref<128x8xf32, #tpu.memory_space<vmem>>, %arg2: memref<8x128xf32, #tpu.memory_space<vmem>>, %arg3: memref<1x128xf32, #tpu.memory_space<vmem>>, %arg4: memref<128x128xf32, #tpu.memory_space<vmem>>, %arg5: memref<1x128xf32, #tpu.memory_space<vmem>>, %arg6: memref<128x4xf32, #tpu.memory_space<vmem>>, %arg7: memref<1x4xf32, #tpu.memory_space<vmem>>, %arg8: memref<128x4xf32, #tpu.memory_space<vmem>>) attributes {dimension_semantics = [#tpu.dimension_semantics<parallel>], iteration_bounds = array<i64: 2>, scalar_prefetch = 0 : i64, scratch_operands = 0 : i64, tpu.core_type = #tpu.core_type<tc>, window_params = [{transform_indices = @transform_0, window_bounds = array<i64: 128, 8>}, {pipeline_mode = #tpu.pipeline_mode<synchronous>, transform_indices = @transform_1, window_bounds = array<i64: 8, 128>}, {pipeline_mode = #tpu.pipeline_mode<synchronous>, transform_indices = @transform_2, window_bounds = array<i64: 1, 128>}, {pipeline_mode = #tpu.pipeline_mode<synchronous>, transform_indices = @transform_3, window_bounds = array<i64: 128, 128>}, {pipeline_mode = #tpu.pipeline_mode<synchronous>, transform_indices = @transform_4, window_bounds = array<i64: 1, 128>}, {pipeline_mode = #tpu.pipeline_mode<synchronous>, transform_indices = @transform_5, window_bounds = array<i64: 128, 4>}, {pipeline_mode = #tpu.pipeline_mode<synchronous>, transform_indices = @transform_6, window_bounds = array<i64: 1, 4>}, {transform_indices = @transform_7, window_bounds = array<i64: 128, 4>}]} {
    %c0 = arith.constant 0 : index
    %c0_0 = arith.constant 0 : index
    %0 = vector.load %arg1[%c0, %c0_0] : memref<128x8xf32, #tpu.memory_space<vmem>>, vector<128x8xf32>
    %c0_1 = arith.constant 0 : index
    %c0_2 = arith.constant 0 : index
    %1 = vector.load %arg2[%c0_1, %c0_2] : memref<8x128xf32, #tpu.memory_space<vmem>>, vector<8x128xf32>
    %cst = arith.constant dense<0.000000e+00> : vector<128x128xf32>
    %2 = tpu.matmul %0, %1, %cst {dimension_numbers = #tpu.dot_dimension_numbers<[1], [0], [0], [1], [0, 0, 1, 1], [], []>} : vector<128x8xf32>, vector<8x128xf32>, vector<128x128xf32> -> vector<128x128xf32>
    %c0_3 = arith.constant 0 : index
    %c0_4 = arith.constant 0 : index
    %3 = vector.load %arg3[%c0_3, %c0_4] : memref<1x128xf32, #tpu.memory_space<vmem>>, vector<1x128xf32>
    %4 = vector.broadcast %3 : vector<1x128xf32> to vector<128x128xf32>
    %5 = arith.addf %2, %4 : vector<128x128xf32>
    %cst_5 = arith.constant 0.000000e+00 : f32
    %6 = vector.broadcast %cst_5 : f32 to vector<128x128xf32>
    %7 = arith.maximumf %5, %6 : vector<128x128xf32>
    %8 = math.absf %5 : vector<128x128xf32>
    %cst_6 = arith.constant 0.000000e+00 : f32
    %9 = vector.broadcast %cst_6 : f32 to vector<128x128xf32>
    %10 = arith.subf %9, %8 : vector<128x128xf32>
    %11 = math.exp %10 : vector<128x128xf32>
    %12 = math.log1p %11 : vector<128x128xf32>
    %13 = arith.addf %7, %12 : vector<128x128xf32>
    %c0_7 = arith.constant 0 : index
    %c0_8 = arith.constant 0 : index
    %14 = vector.load %arg4[%c0_7, %c0_8] : memref<128x128xf32, #tpu.memory_space<vmem>>, vector<128x128xf32>
    %cst_9 = arith.constant dense<0.000000e+00> : vector<128x128xf32>
    %15 = tpu.matmul %13, %14, %cst_9 {dimension_numbers = #tpu.dot_dimension_numbers<[1], [0], [0], [1], [0, 0, 1, 1], [], []>} : vector<128x128xf32>, vector<128x128xf32>, vector<128x128xf32> -> vector<128x128xf32>
    %c0_10 = arith.constant 0 : index
    %c0_11 = arith.constant 0 : index
    %16 = vector.load %arg5[%c0_10, %c0_11] : memref<1x128xf32, #tpu.memory_space<vmem>>, vector<1x128xf32>
    %17 = vector.broadcast %16 : vector<1x128xf32> to vector<128x128xf32>
    %18 = arith.addf %15, %17 : vector<128x128xf32>
    %cst_12 = arith.constant 0.000000e+00 : f32
    %19 = vector.broadcast %cst_12 : f32 to vector<128x128xf32>
    %20 = arith.maximumf %18, %19 : vector<128x128xf32>
    %21 = math.absf %18 : vector<128x128xf32>
    %cst_13 = arith.constant 0.000000e+00 : f32
    %22 = vector.broadcast %cst_13 : f32 to vector<128x128xf32>
    %23 = arith.subf %22, %21 : vector<128x128xf32>
    %24 = math.exp %23 : vector<128x128xf32>
    %25 = math.log1p %24 : vector<128x128xf32>
    %26 = arith.addf %20, %25 : vector<128x128xf32>
    %c0_14 = arith.constant 0 : index
    %c0_15 = arith.constant 0 : index
    %27 = vector.load %arg6[%c0_14, %c0_15] : memref<128x4xf32, #tpu.memory_space<vmem>>, vector<128x4xf32>
    %cst_16 = arith.constant dense<0.000000e+00> : vector<128x4xf32>
    %28 = tpu.matmul %26, %27, %cst_16 {dimension_numbers = #tpu.dot_dimension_numbers<[1], [0], [0], [1], [0, 0, 1, 1], [], []>} : vector<128x128xf32>, vector<128x4xf32>, vector<128x4xf32> -> vector<128x4xf32>
    %c0_17 = arith.constant 0 : index
    %c0_18 = arith.constant 0 : index
    %29 = vector.load %arg7[%c0_17, %c0_18] : memref<1x4xf32, #tpu.memory_space<vmem>>, vector<1x4xf32>
    %30 = vector.broadcast %29 : vector<1x4xf32> to vector<128x4xf32>
    %31 = arith.addf %28, %30 : vector<128x4xf32>
    %c0_19 = arith.constant 0 : index
    %c0_20 = arith.constant 0 : index
    %32 = vector.load %arg8[%c0_19, %c0_20] : memref<128x4xf32, #tpu.memory_space<vmem>>, vector<128x4xf32>
    tpu.vector_store %arg8[%c0_19, %c0_20], %31 {strides = array<i32>} : memref<128x4xf32, #tpu.memory_space<vmem>>, vector<128x4xf32>,
    return
  }
  func.func @transform_0(%arg0: i32) -> (i32, i32) {
    %c0_i32 = arith.constant 0 : i32
    %c0_i32_0 = arith.constant 0 : i32
    return %arg0, %c0_i32 : i32, i32
  }
  func.func @transform_1(%arg0: i32) -> (i32, i32) {
    %c0_i32 = arith.constant 0 : i32
    %c0_i32_0 = arith.constant 0 : i32
    %c0_i32_1 = arith.constant 0 : i32
    return %c0_i32, %c0_i32_0 : i32, i32
  }
  func.func @transform_2(%arg0: i32) -> (i32, i32) {
    %c0_i32 = arith.constant 0 : i32
    %c0_i32_0 = arith.constant 0 : i32
    %c0_i32_1 = arith.constant 0 : i32
    return %c0_i32, %c0_i32_0 : i32, i32
  }
  func.func @transform_3(%arg0: i32) -> (i32, i32) {
    %c0_i32 = arith.constant 0 : i32
    %c0_i32_0 = arith.constant 0 : i32
    %c0_i32_1 = arith.constant 0 : i32
    return %c0_i32, %c0_i32_0 : i32, i32
  }
  func.func @transform_4(%arg0: i32) -> (i32, i32) {
    %c0_i32 = arith.constant 0 : i32
    %c0_i32_0 = arith.constant 0 : i32
    %c0_i32_1 = arith.constant 0 : i32
    return %c0_i32, %c0_i32_0 : i32, i32
  }
  func.func @transform_5(%arg0: i32) -> (i32, i32) {
    %c0_i32 = arith.constant 0 : i32
    %c0_i32_0 = arith.constant 0 : i32
    %c0_i32_1 = arith.constant 0 : i32
    return %c0_i32, %c0_i32_0 : i32, i32
  }
  func.func @transform_6(%arg0: i32) -> (i32, i32) {
    %c0_i32 = arith.constant 0 : i32
    %c0_i32_0 = arith.constant 0 : i32
    %c0_i32_1 = arith.constant 0 : i32
    return %c0_i32, %c0_i32_0 : i32, i32
  }
  func.func @transform_7(%arg0: i32) -> (i32, i32) {
    %c0_i32 = arith.constant 0 : i32
    %c0_i32_0 = arith.constant 0 : i32
    return %arg0, %c0_i32 : i32, i32
  }
}

</mosaic_0001>

<llo_original>
// kernel: tpu_custom_call.1
$region0: #{tpu_custom_call.1}
  #allocation0 [shape = 'u32[]', space=smem, size = 0x4, offset = 0x4, fixed_abs, tag = 'smem constant byte address 0x4 - core index']
  #allocation1 [shape = 'u32[144,128]{1,0:T(1,128)}', space=vmem, size = 0x12000, scoped, tag = 'internal scratch']
  %s0 = inlined_call_operand.vmem [shape: f32[256,8], index: 0, kind: input, shape index: {}]
  %s1 = inlined_call_operand.vmem [shape: f32[8,128], index: 1, kind: input, shape index: {}]
  %s2 = inlined_call_operand.vmem [shape: f32[1,128], index: 2, kind: input, shape index: {}]
  %s3 = inlined_call_operand.vmem [shape: f32[128,128], index: 3, kind: input, shape index: {}]
  %s4 = inlined_call_operand.vmem [shape: f32[1,128], index: 4, kind: input, shape index: {}]
  %s5 = inlined_call_operand.vmem [shape: f32[128,4], index: 5, kind: input, shape index: {}]
  %s6 = inlined_call_operand.vmem [shape: f32[1,4], index: 6, kind: input, shape index: {}]
  %s7 = inlined_call_operand.vmem [shape: f32[256,4], index: 7, kind: output, shape index: {}]
  %s8 = sld [smem:[#allocation0]]
  $region61: #{tpu_custom_call.1} parent=0
    _
  %s10 = ssub.s32 1, %s8
  %s11 = scalar_select 0, %s10, %s8
  loop: start=0, step=1, limit=4
  $region2: #{tpu_custom_call.1} parent=0 // loop_pre_header
    _
  $region3: #{tpu_custom_call.1} parent=0 // loop_header
    %s13 = sphi 0, %s17
    %p14 = scmp.ge.s32.totalorder %s13, 4
    %s23 = sphi 0, %s25
    %s26 = sphi 0, %s23
    %s27 = sphi 0, %s26
    %s43 = sphi 0, %s27
    %s47 = sphi 0, %s47
    %s49 = sphi 0, %s47
    %s50 = sphi 0, %s49
    %s64 = sphi 0, %s50
    %s68 = sphi 0, %s68
    %s70 = sphi 0, %s68
    %s71 = sphi 0, %s70
    %s85 = sphi 0, %s71
    %s89 = sphi 0, %s89
    %s91 = sphi 0, %s89
    %s92 = sphi 0, %s91
    %s106 = sphi 0, %s92
    %s110 = sphi 0, %s110
    %s112 = sphi 0, %s110
    %s113 = sphi 0, %s112
    %s127 = sphi 0, %s113
    %s131 = sphi 0, %s131
    %s133 = sphi 0, %s131
    %s134 = sphi 0, %s133
    %s148 = sphi 0, %s134
    %s152 = sphi 0, %s152
    %s154 = sphi 0, %s152
    %s155 = sphi 0, %s154
    %s169 = sphi 0, %s155
    %s175 = sphi 0, %s177
    %s178 = sphi 0, %s175
    %s179 = sphi 0, %s178
    %s195 = sphi 0, %s179
  $region4: #{tpu_custom_call.1} parent=0 // loop_header_branch
    %16 = sbr.rel (%p14) target = $region8
  $region5: #{tpu_custom_call.1} parent=0 // loop_body
    %s18 = ssub.s32 %s13, 1
    %s19 = ssub.s32 %s13, 2
    %s20 = sadd.s32 %s13, 1
    %s21 = ssub.s32 %s13, %s20
    %p22 = scmp.eq.s32.totalorder %s21, 0
    %s24 = sadd.s32 %s23, 1
    %s25 = scalar_select %p22, %s23, %s24
    %p28 = pneg %p22
    %p29 = scmp.eq.s32.totalorder %s13, 1
    %p30 = por %p28, %p29
    %p31 = scmp.ne.s32.totalorder %s23, %s26
    %p32 = scmp.eq.s32.totalorder %s13, 0
    %p33 = por %p31, %p32
    %p34 = scmp.ne.s32.totalorder %s23, %s26
    %p35 = scmp.eq.s32.totalorder %s18, 1
    %p36 = por %p34, %p35
    %p37 = scmp.ne.s32.totalorder %s26, %s27
    %p38 = scmp.eq.s32.totalorder %s18, 0
    %p39 = por %p37, %p38
    %p40 = scmp.ne.s32.totalorder %s26, %s27
    %p41 = scmp.eq.s32.totalorder %s19, 1
    %p42 = por %p40, %p41
    %p44 = scmp.ne.s32.totalorder %s27, %s43
    %p45 = scmp.eq.s32.totalorder %s19, 0
    %p46 = por %p44, %p45
    %s48 = sadd.s32 %s47, 1
    %p51 = scmp.eq.s32.totalorder %s13, 1
    %p52 = scmp.ne.s32.totalorder %s47, %s49
    %p53 = scmp.eq.s32.totalorder %s13, 0
    %p54 = por %p52, %p53
    %p55 = scmp.ne.s32.totalorder %s47, %s49
    %p56 = scmp.eq.s32.totalorder %s18, 1
    %p57 = por %p55, %p56
    %p58 = scmp.ne.s32.totalorder %s49, %s50
    %p59 = scmp.eq.s32.totalorder %s18, 0
    %p60 = por %p58, %p59
    %p61 = scmp.ne.s32.totalorder %s49, %s50
    %p62 = scmp.eq.s32.totalorder %s19, 1
    %p63 = por %p61, %p62
    %p65 = scmp.ne.s32.totalorder %s50, %s64
    %p66 = scmp.eq.s32.totalorder %s19, 0
    %p67 = por %p65, %p66
    %s69 = sadd.s32 %s68, 1
    %p72 = scmp.eq.s32.totalorder %s13, 1
    %p73 = scmp.ne.s32.totalorder %s68, %s70
    %p74 = scmp.eq.s32.totalorder %s13, 0
    %p75 = por %p73, %p74
    %p76 = scmp.ne.s32.totalorder %s68, %s70
    %p77 = scmp.eq.s32.totalorder %s18, 1
    %p78 = por %p76, %p77
    %p79 = scmp.ne.s32.totalorder %s70, %s71
    %p80 = scmp.eq.s32.totalorder %s18, 0
    %p81 = por %p79, %p80
    %p82 = scmp.ne.s32.totalorder %s70, %s71
    %p83 = scmp.eq.s32.totalorder %s19, 1
    %p84 = por %p82, %p83
    %p86 = scmp.ne.s32.totalorder %s71, %s85
    %p87 = scmp.eq.s32.totalorder %s19, 0
    %p88 = por %p86, %p87
    %s90 = sadd.s32 %s89, 1
    %p93 = scmp.eq.s32.totalorder %s13, 1
    %p94 = scmp.ne.s32.totalorder %s89, %s91
    %p95 = scmp.eq.s32.totalorder %s13, 0
    %p96 = por %p94, %p95
    %p97 = scmp.ne.s32.totalorder %s89, %s91
    %p98 = scmp.eq.s32.totalorder %s18, 1
    %p99 = por %p97, %p98
    %p100 = scmp.ne.s32.totalorder %s91, %s92
    %p101 = scmp.eq.s32.totalorder %s18, 0
    %p102 = por %p100, %p101
    %p103 = scmp.ne.s32.totalorder %s91, %s92
    %p104 = scmp.eq.s32.totalorder %s19, 1
    %p105 = por %p103, %p104
    %p107 = scmp.ne.s32.totalorder %s92, %s106
    %p108 = scmp.eq.s32.totalorder %s19, 0
    %p109 = por %p107, %p108
    %s111 = sadd.s32 %s110, 1
    %p114 = scmp.eq.s32.totalorder %s13, 1
    %p115 = scmp.ne.s32.totalorder %s110, %s112
    %p116 = scmp.eq.s32.totalorder %s13, 0
    %p117 = por %p115, %p116
    %p118 = scmp.ne.s32.totalorder %s110, %s112
    %p119 = scmp.eq.s32.totalorder %s18, 1
    %p120 = por %p118, %p119
    %p121 = scmp.ne.s32.totalorder %s112, %s113
    %p122 = scmp.eq.s32.totalorder %s18, 0
    %p123 = por %p121, %p122
    %p124 = scmp.ne.s32.totalorder %s112, %s113
    %p125 = scmp.eq.s32.totalorder %s19, 1
    %p126 = por %p124, %p125
    %p128 = scmp.ne.s32.totalorder %s113, %s127
    %p129 = scmp.eq.s32.totalorder %s19, 0
    %p130 = por %p128, %p129
    %s132 = sadd.s32 %s131, 1
    %p135 = scmp.eq.s32.totalorder %s13, 1
    %p136 = scmp.ne.s32.totalorder %s131, %s133
    %p137 = scmp.eq.s32.totalorder %s13, 0
    %p138 = por %p136, %p137
    %p139 = scmp.ne.s32.totalorder %s131, %s133
    %p140 = scmp.eq.s32.totalorder %s18, 1
    %p141 = por %p139, %p140
    %p142 = scmp.ne.s32.totalorder %s133, %s134
    %p143 = scmp.eq.s32.totalorder %s18, 0
    %p144 = por %p142, %p143
    %p145 = scmp.ne.s32.totalorder %s133, %s134
    %p146 = scmp.eq.s32.totalorder %s19, 1
    %p147 = por %p145, %p146
    %p149 = scmp.ne.s32.totalorder %s134, %s148
    %p150 = scmp.eq.s32.totalorder %s19, 0
    %p151 = por %p149, %p150
    %s153 = sadd.s32 %s152, 1
    %p156 = scmp.eq.s32.totalorder %s13, 1
    %p157 = scmp.ne.s32.totalorder %s152, %s154
    %p158 = scmp.eq.s32.totalorder %s13, 0
    %p159 = por %p157, %p158
    %p160 = scmp.ne.s32.totalorder %s152, %s154
    %p161 = scmp.eq.s32.totalorder %s18, 1
    %p162 = por %p160, %p161
    %p163 = scmp.ne.s32.totalorder %s154, %s155
    %p164 = scmp.eq.s32.totalorder %s18, 0
    %p165 = por %p163, %p164
    %p166 = scmp.ne.s32.totalorder %s154, %s155
    %p167 = scmp.eq.s32.totalorder %s19, 1
    %p168 = por %p166, %p167
    %p170 = scmp.ne.s32.totalorder %s155, %s169
    %p171 = scmp.eq.s32.totalorder %s19, 0
    %p172 = por %p170, %p171
    %s173 = ssub.s32 %s13, %s20
    %p174 = scmp.eq.s32.totalorder %s173, 0
    %s176 = sadd.s32 %s175, 1
    %s177 = scalar_select %p174, %s175, %s176
    %p180 = pneg %p174
    %p181 = scmp.eq.s32.totalorder %s13, 1
    %p182 = por %p180, %p181
    %p183 = scmp.ne.s32.totalorder %s175, %s178
    %p184 = scmp.eq.s32.totalorder %s13, 0
    %p185 = por %p183, %p184
    %p186 = scmp.ne.s32.totalorder %s175, %s178
    %p187 = scmp.eq.s32.totalorder %s18, 1
    %p188 = por %p186, %p187
    %p189 = scmp.ne.s32.totalorder %s178, %s179
    %p190 = scmp.eq.s32.totalorder %s18, 0
    %p191 = por %p189, %p190
    %p192 = scmp.ne.s32.totalorder %s178, %s179
    %p193 = scmp.eq.s32.totalorder %s19, 1
    %p194 = por %p192, %p193
    %p196 = scmp.ne.s32.totalorder %s179, %s195
    %p197 = scmp.eq.s32.totalorder %s19, 0
    %p198 = por %p196, %p197
    %p199 = scmp.le.s32.totalorder 1, %s13
    %p200 = scmp.lt.s32.totalorder %s13, 3
    %p201 = pnand %p199, %p200
    %p202 = pneg %p201
    // Predicated region
    $region9: #{tpu_custom_call.1} parent=5 // pred_check
      _
    $region10: #{tpu_custom_call.1} parent=5 // pred_check_branch
      %204 = sbr.rel (%p201) target = $region12
    $region11: #{tpu_custom_call.1} parent=5 // pred_region
      %s205 = ssub.s32 %s13, 1
      // Predicated region
      $region13: #{tpu_custom_call.1} parent=11 // pred_check
        %p206 = pneg %p60
      $region14: #{tpu_custom_call.1} parent=11 // pred_check_branch
        %208 = sbr.rel (%p206) target = $region16
      $region15: #{tpu_custom_call.1} parent=11 // pred_region
        _
      $region16: #{tpu_custom_call.1} parent=11 // pred_fallthru
        _
      // Predicated region
      $region17: #{tpu_custom_call.1} parent=11 // pred_check
        %p209 = pneg %p81
      $region18: #{tpu_custom_call.1} parent=11 // pred_check_branch
        %211 = sbr.rel (%p209) target = $region20
      $region19: #{tpu_custom_call.1} parent=11 // pred_region
        _
      $region20: #{tpu_custom_call.1} parent=11 // pred_fallthru
        _
      // Predicated region
      $region21: #{tpu_custom_call.1} parent=11 // pred_check
        %p212 = pneg %p102
      $region22: #{tpu_custom_call.1} parent=11 // pred_check_branch
        %214 = sbr.rel (%p212) target = $region24
      $region23: #{tpu_custom_call.1} parent=11 // pred_region
        _
      $region24: #{tpu_custom_call.1} parent=11 // pred_fallthru
        _
      // Predicated region
      $region25: #{tpu_custom_call.1} parent=11 // pred_check
        %p215 = pneg %p123
      $region26: #{tpu_custom_call.1} parent=11 // pred_check_branch
        %217 = sbr.rel (%p215) target = $region28
      $region27: #{tpu_custom_call.1} parent=11 // pred_region
        _
      $region28: #{tpu_custom_call.1} parent=11 // pred_fallthru
        _
      // Predicated region
      $region29: #{tpu_custom_call.1} parent=11 // pred_check
        %p218 = pneg %p144
      $region30: #{tpu_custom_call.1} parent=11 // pred_check_branch
        %220 = sbr.rel (%p218) target = $region32
      $region31: #{tpu_custom_call.1} parent=11 // pred_region
        _
      $region32: #{tpu_custom_call.1} parent=11 // pred_fallthru
        _
      // Predicated region
      $region33: #{tpu_custom_call.1} parent=11 // pred_check
        %p221 = pneg %p165
      $region34: #{tpu_custom_call.1} parent=11 // pred_check_branch
        %223 = sbr.rel (%p221) target = $region36
      $region35: #{tpu_custom_call.1} parent=11 // pred_region
        _
      $region36: #{tpu_custom_call.1} parent=11 // pred_fallthru
        _
    $region12: #{tpu_custom_call.1} parent=5 // pred_fallthru
      _
    %p224 = scmp.lt.s32.totalorder %s13, 2
    // Predicated region
    $region37: #{tpu_custom_call.1} parent=5 // pred_check
      %p225 = pneg %p224
    $region38: #{tpu_custom_call.1} parent=5 // pred_check_branch
      %227 = sbr.rel (%p225) target = $region40
    $region39: #{tpu_custom_call.1} parent=5 // pred_region
      // Predicated region
      $region41: #{tpu_custom_call.1} parent=39 // pred_check
        %p228 = pneg %p33
      $region42: #{tpu_custom_call.1} parent=39 // pred_check_branch
        %230 = sbr.rel (%p228) target = $region44
      $region43: #{tpu_custom_call.1} parent=39 // pred_region
        %s231 = smul.u32 16, %s13
        %p232 = scmp.lt.s32.totalorder %s231, 31
        %s233 = scalar_select %p232, %s231, 31
        %s234 = smul.addr %s233, 8
        %s235 = scalar_lea.vmem %s0, %s234
        %s236 = smul.u32 16, %s13
      $region44: #{tpu_custom_call.1} parent=39 // pred_fallthru
        _
    $region40: #{tpu_custom_call.1} parent=5 // pred_fallthru
      _
    %p237 = scmp.le.s32.totalorder 1, %s13
    %p238 = scmp.lt.s32.totalorder %s13, 3
    %p239 = pnand %p237, %p238
    %p240 = pneg %p239
    // Predicated region
    $region45: #{tpu_custom_call.1} parent=5 // pred_check
      _
    $region46: #{tpu_custom_call.1} parent=5 // pred_check_branch
      %242 = sbr.rel (%p239) target = $region48
    $region47: #{tpu_custom_call.1} parent=5 // pred_region
      %s243 = ssub.s32 %s13, 1
      %s244 = smul.u32 16, %s18
      %p245 = scmp.lt.s32.totalorder %s244, 31
      %s246 = scalar_select %p245, %s244, 31
      %s247 = smul.addr %s246, 8
      %s248 = scalar_lea.vmem %s0, %s247
      %p249 = pneg %p39
      %p250 = pneg %p36
      %p251 = pneg %p60
      %p252 = pneg %p57
      %p253 = pneg %p81
      %p254 = pneg %p78
      %p255 = pneg %p102
      %p256 = pneg %p99
      %p257 = pneg %p123
      %p258 = pneg %p120
      %p259 = pneg %p144
      %p260 = pneg %p141
      %p261 = pneg %p165
      %p262 = pneg %p162
      %p263 = pneg %p191
      %p264 = pneg %p188
      %s265 = smul.u32 16, %s18
      %p266 = scmp.lt.s32.totalorder %s265, 31
      %s267 = scalar_select %p266, %s265, 31
      %s268 = smul.addr %s267, 8
      %s269 = scalar_lea.vmem %s7, %s268
      %s270 = smul.u32 16, %s18
      %p271 = scmp.lt.s32.totalorder %s270, 31
      %s272 = scalar_select %p271, %s270, 31
      %s273 = smul.addr %s272, 8
      %s274 = scalar_lea.vmem %s0, %s273
      %s275 = smul.u32 16, %s18
      %s276 = smul.u32 16, %s18
      %p277 = scmp.lt.s32.totalorder %s276, 31
      %s278 = scalar_select %p277, %s276, 31
      %s279 = smul.addr %s278, 8
      %s280 = scalar_lea.vmem %s7, %s279
      %s281 = smul.u32 16, %s18
      %v282 = vld [vmem:[%s274] sm:$0xff]
      %v283 = vld [vmem:[%s274 + $0x8] sm:$0xff]
      %v284 = vld [vmem:[%s274 + $0x10] sm:$0xff]
      %v285 = vld [vmem:[%s274 + $0x18] sm:$0xff]
      %v286 = vld [vmem:[%s274 + $0x20] sm:$0xff]
      %v287 = vld [vmem:[%s274 + $0x28] sm:$0xff]
      %v288 = vld [vmem:[%s274 + $0x30] sm:$0xff]
      %v289 = vld [vmem:[%s274 + $0x38] sm:$0xff]
      %v290 = vld [vmem:[%s274 + $0x40] sm:$0xff]
      %v291 = vld [vmem:[%s274 + $0x48] sm:$0xff]
      %v292 = vld [vmem:[%s274 + $0x50] sm:$0xff]
      %v293 = vld [vmem:[%s274 + $0x58] sm:$0xff]
      %v294 = vld [vmem:[%s274 + $0x60] sm:$0xff]
      %v295 = vld [vmem:[%s274 + $0x68] sm:$0xff]
      %v296 = vld [vmem:[%s274 + $0x70] sm:$0xff]
      %v297 = vld [vmem:[%s274 + $0x78] sm:$0xff]
      %v298 = vld [vmem:[%s1] sm:$0xff]
      %v299 = vld [vmem:[%s2] sm:$0x1]
      %v301 = vlaneseq
      %v302 = vshrl.u32 %v301, 7
      %v303 = vsub.s32 0, %v302
      %v304 = vrot.slane %v299, %v303
      %vm306 = vcmask 64512
      %v308 = vsel %vm306, %v282, 0
      %v311 = vsel %vm306, %v283, 0
      %v314 = vsel %vm306, %v284, 0
      %v317 = vsel %vm306, %v285, 0
      %v320 = vsel %vm306, %v286, 0
      %v323 = vsel %vm306, %v287, 0
      %v326 = vsel %vm306, %v288, 0
      %v329 = vsel %vm306, %v289, 0
      %v332 = vsel %vm306, %v290, 0
      %v335 = vsel %vm306, %v291, 0
      %v338 = vsel %vm306, %v292, 0
      %v341 = vsel %vm306, %v293, 0
      %v344 = vsel %vm306, %v294, 0
      %v347 = vsel %vm306, %v295, 0
      %v350 = vsel %vm306, %v296, 0
      %v353 = vsel %vm306, %v297, 0
      %355 = vmatprep.subr.mxu0 0.0
      %356 = vmatpush1.msra.mxu0 %v298
      %357 = vmatprep.subr.mxu0 0.0
      %358 = vmatpush1.msra.mxu0 0.0
      %359 = vmatprep.subr.mxu0 0.0
      %360 = vmatpush1.msra.mxu0 0.0
      %361 = vmatprep.subr.mxu0 0.0
      %362 = vmatpush1.msra.mxu0 0.0
      %363 = vmatprep.subr.mxu0 0.0
      %364 = vmatpush1.msra.mxu0 0.0
      %365 = vmatprep.subr.mxu0 0.0
      %366 = vmatpush1.msra.mxu0 0.0
      %367 = vmatprep.subr.mxu0 0.0
      %368 = vmatpush1.msra.mxu0 0.0
      %369 = vmatprep.subr.mxu0 0.0
      %370 = vmatpush1.msra.mxu0 0.0
      %371 = vmatprep.subr.mxu0 0.0
      %372 = vmatpush1.msra.mxu0 0.0
      %373 = vmatprep.subr.mxu0 0.0
      %374 = vmatpush1.msra.mxu0 0.0
      %375 = vmatprep.subr.mxu0 0.0
      %376 = vmatpush1.msra.mxu0 0.0
      %377 = vmatprep.subr.mxu0 0.0
      %378 = vmatpush1.msra.mxu0 0.0
      %379 = vmatprep.subr.mxu0 0.0
      %380 = vmatpush1.msra.mxu0 0.0
      %381 = vmatprep.subr.mxu0 0.0
      %382 = vmatpush1.msra.mxu0 0.0
      %383 = vmatprep.subr.mxu0 0.0
      %384 = vmatpush1.msra.mxu0 0.0
      %385 = vmatprep.subr.mxu0 0.0
      %386 = vmatpush1.msra.mxu0 0.0
      %387 = vmatprep.subr.mxu0 0.0
      %388 = vmatpush1.msra.mxu0 0.0
      %389 = vmatprep.subr.mxu0 0.0
      %390 = vmatpush1.msra.mxu0 0.0
      %391 = vmatprep.subr.mxu0 0.0
      %392 = vmatpush1.msra.mxu0 0.0
      %393 = vmatprep.subr.mxu0 0.0
      %394 = vmatpush1.msra.mxu0 0.0
      %395 = vmatprep.subr.mxu0 0.0
      %396 = vmatpush1.msra.mxu0 0.0
      %397 = vmatprep.subr.mxu0 0.0
      %398 = vmatpush1.msra.mxu0 0.0
      %399 = vmatprep.subr.mxu0 0.0
      %400 = vmatpush1.msra.mxu0 0.0
      %401 = vmatprep.subr.mxu0 0.0
      %402 = vmatpush1.msra.mxu0 0.0
      %403 = vmatprep.subr.mxu0 0.0
      %404 = vmatpush1.msra.mxu0 0.0
      %405 = vmatprep.subr.mxu0 0.0
      %406 = vmatpush1.msra.mxu0 0.0
      %407 = vmatprep.subr.mxu0 0.0
      %408 = vmatpush1.msra.mxu0 0.0
      %409 = vmatprep.subr.mxu0 0.0
      %410 = vmatpush1.msra.mxu0 0.0
      %411 = vmatprep.subr.mxu0 0.0
      %412 = vmatpush1.msra.mxu0 0.0
      %413 = vmatprep.subr.mxu0 0.0
      %414 = vmatpush1.msra.mxu0 0.0
      %415 = vmatprep.subr.mxu0 0.0
      %416 = vmatpush1.msra.mxu0 0.0
      %417 = vmatprep.subr.mxu0 0.0
      %418 = vmatpush1.msra.mxu0 0.0
      %419 = vmatprep.mubr.f32.mxu0 0.0
      %420 = vmatmul.mubr.f32.gmra.mrb[0].mxu0 %v308
      %v421 = vpop.f32.mrb[0].mxu0
      %v422 = vadd.f32 %v304, %v421
      %v423 = vpop.f32.mrb[0].mxu0
      %424 = vmatprep.mubr.f32.mxu0 0.0
      %425 = vmatmul.mubr.f32.gmra.mrb[0].mxu0 %v311
      %v426 = vpop.f32.mrb[0].mxu0
      %v427 = vadd.f32 %v304, %v426
      %v428 = vpop.f32.mrb[0].mxu0
      %429 = vmatprep.mubr.f32.mxu0 0.0
      %430 = vmatmul.mubr.f32.gmra.mrb[0].mxu0 %v314
      %v431 = vpop.f32.mrb[0].mxu0
      %v432 = vadd.f32 %v304, %v431
      %v433 = vpop.f32.mrb[0].mxu0
      %434 = vmatprep.mubr.f32.mxu0 0.0
      %435 = vmatmul.mubr.f32.gmra.mrb[0].mxu0 %v317
      %v436 = vpop.f32.mrb[0].mxu0
      %v437 = vadd.f32 %v304, %v436
      %v438 = vpop.f32.mrb[0].mxu0
      %439 = vmatprep.mubr.f32.mxu0 0.0
      %440 = vmatmul.mubr.f32.gmra.mrb[0].mxu0 %v320
      %v441 = vpop.f32.mrb[0].mxu0
      %v442 = vadd.f32 %v304, %v441
      %v443 = vpop.f32.mrb[0].mxu0
      %444 = vmatprep.mubr.f32.mxu0 0.0
      %445 = vmatmul.mubr.f32.gmra.mrb[0].mxu0 %v323
      %v446 = vpop.f32.mrb[0].mxu0
      %v447 = vadd.f32 %v304, %v446
      %v448 = vpop.f32.mrb[0].mxu0
      %449 = vmatprep.mubr.f32.mxu0 0.0
      %450 = vmatmul.mubr.f32.gmra.mrb[0].mxu0 %v326
      %v451 = vpop.f32.mrb[0].mxu0
      %v452 = vadd.f32 %v304, %v451
      %v453 = vpop.f32.mrb[0].mxu0
      %454 = vmatprep.mubr.f32.mxu0 0.0
      %455 = vmatmul.mubr.f32.gmra.mrb[0].mxu0 %v329
      %v456 = vpop.f32.mrb[0].mxu0
      %v457 = vadd.f32 %v304, %v456
      %v458 = vpop.f32.mrb[0].mxu0
      %459 = vmatprep.mubr.f32.mxu0 0.0
      %460 = vmatmul.mubr.f32.gmra.mrb[0].mxu0 %v332
      %v461 = vpop.f32.mrb[0].mxu0
      %v462 = vadd.f32 %v304, %v461
      %v463 = vpop.f32.mrb[0].mxu0
      %464 = vmatprep.mubr.f32.mxu0 0.0
      %465 = vmatmul.mubr.f32.gmra.mrb[0].mxu0 %v335
      %v466 = vpop.f32.mrb[0].mxu0
      %v467 = vadd.f32 %v304, %v466
      %v468 = vpop.f32.mrb[0].mxu0
      %469 = vmatprep.mubr.f32.mxu0 0.0
      %470 = vmatmul.mubr.f32.gmra.mrb[0].mxu0 %v338
      %v471 = vpop.f32.mrb[0].mxu0
      %v472 = vadd.f32 %v304, %v471
      %v473 = vpop.f32.mrb[0].mxu0
      %474 = vmatprep.mubr.f32.mxu0 0.0
      %475 = vmatmul.mubr.f32.gmra.mrb[0].mxu0 %v341
      %v476 = vpop.f32.mrb[0].mxu0
      %v477 = vadd.f32 %v304, %v476
      %v478 = vpop.f32.mrb[0].mxu0
      %479 = vmatprep.mubr.f32.mxu0 0.0
      %480 = vmatmul.mubr.f32.gmra.mrb[0].mxu0 %v344
      %v481 = vpop.f32.mrb[0].mxu0
      %v482 = vadd.f32 %v304, %v481
      %v483 = vpop.f32.mrb[0].mxu0
      %484 = vmatprep.mubr.f32.mxu0 0.0
      %485 = vmatmul.mubr.f32.gmra.mrb[0].mxu0 %v347
      %v486 = vpop.f32.mrb[0].mxu0
      %v487 = vadd.f32 %v304, %v486
      %v488 = vpop.f32.mrb[0].mxu0
      %489 = vmatprep.mubr.f32.mxu0 0.0
      %490 = vmatmul.mubr.f32.gmra.mrb[0].mxu0 %v350
      %v491 = vpop.f32.mrb[0].mxu0
      %v492 = vadd.f32 %v304, %v491
      %v493 = vpop.f32.mrb[0].mxu0
      %494 = vmatprep.mubr.f32.mxu0 0.0
      %495 = vmatmul.mubr.f32.gmra.mrb[0].mxu0 %v353
      %v496 = vpop.f32.mrb[0].mxu0
      %v497 = vadd.f32 %v304, %v496
      %v498 = vpop.f32.mrb[0].mxu0
      %499 = vdwg.mxu0
      %v500 = vmax.f32 %v422, 0.0
      %v501 = vmax.f32 %v427, 0.0
      %v502 = vmax.f32 %v432, 0.0
      %v503 = vmax.f32 %v437, 0.0
      %v504 = vmax.f32 %v442, 0.0
      %v505 = vmax.f32 %v447, 0.0
      %v506 = vmax.f32 %v452, 0.0
      %v507 = vmax.f32 %v457, 0.0
      %v508 = vmax.f32 %v462, 0.0
      %v509 = vmax.f32 %v467, 0.0
      %v510 = vmax.f32 %v472, 0.0
      %v511 = vmax.f32 %v477, 0.0
      %v512 = vmax.f32 %v482, 0.0
      %v513 = vmax.f32 %v487, 0.0
      %v514 = vmax.f32 %v492, 0.0
      %v515 = vmax.f32 %v497, 0.0
      %v516 = vand.u32 2147483647, %v422
      %v517 = vand.u32 2147483647, %v427
      %v518 = vand.u32 2147483647, %v432
      %v519 = vand.u32 2147483647, %v437
      %v520 = vand.u32 2147483647, %v442
      %v521 = vand.u32 2147483647, %v447
      %v522 = vand.u32 2147483647, %v452
      %v523 = vand.u32 2147483647, %v457
      %v524 = vand.u32 2147483647, %v462
      %v525 = vand.u32 2147483647, %v467
      %v526 = vand.u32 2147483647, %v472
      %v527 = vand.u32 2147483647, %v477
      %v528 = vand.u32 2147483647, %v482
      %v529 = vand.u32 2147483647, %v487
      %v530 = vand.u32 2147483647, %v492
      %v531 = vand.u32 2147483647, %v497
      %v532 = vsub.f32 0.0, %v516
      %v533 = vsub.f32 0.0, %v517
      %v534 = vsub.f32 0.0, %v518
      %v535 = vsub.f32 0.0, %v519
      %v536 = vsub.f32 0.0, %v520
      %v537 = vsub.f32 0.0, %v521
      %v538 = vsub.f32 0.0, %v522
      %v539 = vsub.f32 0.0, %v523
      %v540 = vsub.f32 0.0, %v524
      %v541 = vsub.f32 0.0, %v525
      %v542 = vsub.f32 0.0, %v526
      %v543 = vsub.f32 0.0, %v527
      %v544 = vsub.f32 0.0, %v528
      %v545 = vsub.f32 0.0, %v529
      %v546 = vsub.f32 0.0, %v530
      %v547 = vsub.f32 0.0, %v531
      %v548 = vmul.f32 %v532, 1.442695
      %v549 = vpow.pop %v548
      %v550 = vmul.f32 %v533, 1.442695
      %v551 = vpow.pop %v550
      %v552 = vmul.f32 %v534, 1.442695
      %v553 = vpow.pop %v552
      %v554 = vmul.f32 %v535, 1.442695
      %v555 = vpow.pop %v554
      %v556 = vmul.f32 %v536, 1.442695
      %v557 = vpow.pop %v556
      %v558 = vmul.f32 %v537, 1.442695
      %v559 = vpow.pop %v558
      %v560 = vmul.f32 %v538, 1.442695
      %v561 = vpow.pop %v560
      %v562 = vmul.f32 %v539, 1.442695
      %v563 = vpow.pop %v562
      %v564 = vmul.f32 %v540, 1.442695
      %v565 = vpow.pop %v564
      %v566 = vmul.f32 %v541, 1.442695
      %v567 = vpow.pop %v566
      %v568 = vmul.f32 %v542, 1.442695
      %v569 = vpow.pop %v568
      %v570 = vmul.f32 %v543, 1.442695
      %v571 = vpow.pop %v570
      %v572 = vmul.f32 %v544, 1.442695
      %v573 = vpow.pop %v572
      %v574 = vmul.f32 %v545, 1.442695
      %v575 = vpow.pop %v574
      %v576 = vmul.f32 %v546, 1.442695
      %v577 = vpow.pop %v576
      %v578 = vmul.f32 %v547, 1.442695
      %v579 = vpow.pop %v578
      %v580 = vadd.f32 %v549, 1.0
      %v581 = vlog2.pop %v580
      %v582 = vmul.f32 %v581, 0.6931472
      %v583 = vmul.f32 -0.5, %v549
      %v584 = vadd.f32 %v583, 1.0
      %v585 = vmul.f32 %v584, %v549
      %v586 = vand.u32 2147483647, %v549
      %vm587 = vcmp.lt.f32.partialorder %v586, 0.0004427343
      %v588 = vsel %vm587, %v585, %v582
      %v589 = vadd.f32 %v551, 1.0
      %v590 = vlog2.pop %v589
      %v591 = vmul.f32 %v590, 0.6931472
      %v592 = vmul.f32 -0.5, %v551
      %v593 = vadd.f32 %v592, 1.0
      %v594 = vmul.f32 %v593, %v551
      %v595 = vand.u32 2147483647, %v551
      %vm596 = vcmp.lt.f32.partialorder %v595, 0.0004427343
      %v597 = vsel %vm596, %v594, %v591
      %v598 = vadd.f32 %v553, 1.0
      %v599 = vlog2.pop %v598
      %v600 = vmul.f32 %v599, 0.6931472
      %v601 = vmul.f32 -0.5, %v553
      %v602 = vadd.f32 %v601, 1.0
      %v603 = vmul.f32 %v602, %v553
      %v604 = vand.u32 2147483647, %v553
      %vm605 = vcmp.lt.f32.partialorder %v604, 0.0004427343
      %v606 = vsel %vm605, %v603, %v600
      %v607 = vadd.f32 %v555, 1.0
      %v608 = vlog2.pop %v607
      %v609 = vmul.f32 %v608, 0.6931472
      %v610 = vmul.f32 -0.5, %v555
      %v611 = vadd.f32 %v610, 1.0
      %v612 = vmul.f32 %v611, %v555
      %v613 = vand.u32 2147483647, %v555
      %vm614 = vcmp.lt.f32.partialorder %v613, 0.0004427343
      %v615 = vsel %vm614, %v612, %v609
      %v616 = vadd.f32 %v557, 1.0
      %v617 = vlog2.pop %v616
      %v618 = vmul.f32 %v617, 0.6931472
      %v619 = vmul.f32 -0.5, %v557
      %v620 = vadd.f32 %v619, 1.0
      %v621 = vmul.f32 %v620, %v557
      %v622 = vand.u32 2147483647, %v557
      %vm623 = vcmp.lt.f32.partialorder %v622, 0.0004427343
      %v624 = vsel %vm623, %v621, %v618
      %v625 = vadd.f32 %v559, 1.0
      %v626 = vlog2.pop %v625
      %v627 = vmul.f32 %v626, 0.6931472
      %v628 = vmul.f32 -0.5, %v559
      %v629 = vadd.f32 %v628, 1.0
      %v630 = vmul.f32 %v629, %v559
      %v631 = vand.u32 2147483647, %v559
      %vm632 = vcmp.lt.f32.partialorder %v631, 0.0004427343
      %v633 = vsel %vm632, %v630, %v627
      %v634 = vadd.f32 %v561, 1.0
      %v635 = vlog2.pop %v634
      %v636 = vmul.f32 %v635, 0.6931472
      %v637 = vmul.f32 -0.5, %v561
      %v638 = vadd.f32 %v637, 1.0
      %v639 = vmul.f32 %v638, %v561
      %v640 = vand.u32 2147483647, %v561
      %vm641 = vcmp.lt.f32.partialorder %v640, 0.0004427343
      %v642 = vsel %vm641, %v639, %v636
      %v643 = vadd.f32 %v563, 1.0
      %v644 = vlog2.pop %v643
      %v645 = vmul.f32 %v644, 0.6931472
      %v646 = vmul.f32 -0.5, %v563
      %v647 = vadd.f32 %v646, 1.0
      %v648 = vmul.f32 %v647, %v563
      %v649 = vand.u32 2147483647, %v563
      %vm650 = vcmp.lt.f32.partialorder %v649, 0.0004427343
      %v651 = vsel %vm650, %v648, %v645
      %v652 = vadd.f32 %v565, 1.0
      %v653 = vlog2.pop %v652
      %v654 = vmul.f32 %v653, 0.6931472
      %v655 = vmul.f32 -0.5, %v565
      %v656 = vadd.f32 %v655, 1.0
      %v657 = vmul.f32 %v656, %v565
      %v658 = vand.u32 2147483647, %v565
      %vm659 = vcmp.lt.f32.partialorder %v658, 0.0004427343
      %v660 = vsel %vm659, %v657, %v654
      %v661 = vadd.f32 %v567, 1.0
      %v662 = vlog2.pop %v661
      %v663 = vmul.f32 %v662, 0.6931472
      %v664 = vmul.f32 -0.5, %v567
      %v665 = vadd.f32 %v664, 1.0
      %v666 = vmul.f32 %v665, %v567
      %v667 = vand.u32 2147483647, %v567
      %vm668 = vcmp.lt.f32.partialorder %v667, 0.0004427343
      %v669 = vsel %vm668, %v666, %v663
      %v670 = vadd.f32 %v569, 1.0
      %v671 = vlog2.pop %v670
      %v672 = vmul.f32 %v671, 0.6931472
      %v673 = vmul.f32 -0.5, %v569
      %v674 = vadd.f32 %v673, 1.0
      %v675 = vmul.f32 %v674, %v569
      %v676 = vand.u32 2147483647, %v569
      %vm677 = vcmp.lt.f32.partialorder %v676, 0.0004427343
      %v678 = vsel %vm677, %v675, %v672
      %v679 = vadd.f32 %v571, 1.0
      %v680 = vlog2.pop %v679
      %v681 = vmul.f32 %v680, 0.6931472
      %v682 = vmul.f32 -0.5, %v571
      %v683 = vadd.f32 %v682, 1.0
      %v684 = vmul.f32 %v683, %v571
      %v685 = vand.u32 2147483647, %v571
      %vm686 = vcmp.lt.f32.partialorder %v685, 0.0004427343
      %v687 = vsel %vm686, %v684, %v681
      %v688 = vadd.f32 %v573, 1.0
      %v689 = vlog2.pop %v688
      %v690 = vmul.f32 %v689, 0.6931472
      %v691 = vmul.f32 -0.5, %v573
      %v692 = vadd.f32 %v691, 1.0
      %v693 = vmul.f32 %v692, %v573
      %v694 = vand.u32 2147483647, %v573
      %vm695 = vcmp.lt.f32.partialorder %v694, 0.0004427343
      %v696 = vsel %vm695, %v693, %v690
      %v697 = vadd.f32 %v575, 1.0
      %v698 = vlog2.pop %v697
      %v699 = vmul.f32 %v698, 0.6931472
      %v700 = vmul.f32 -0.5, %v575
      %v701 = vadd.f32 %v700, 1.0
      %v702 = vmul.f32 %v701, %v575
      %v703 = vand.u32 2147483647, %v575
      %vm704 = vcmp.lt.f32.partialorder %v703, 0.0004427343
      %v705 = vsel %vm704, %v702, %v699
      %v706 = vadd.f32 %v577, 1.0
      %v707 = vlog2.pop %v706
      %v708 = vmul.f32 %v707, 0.6931472
      %v709 = vmul.f32 -0.5, %v577
      %v710 = vadd.f32 %v709, 1.0
      %v711 = vmul.f32 %v710, %v577
      %v712 = vand.u32 2147483647, %v577
      %vm713 = vcmp.lt.f32.partialorder %v712, 0.0004427343
      %v714 = vsel %vm713, %v711, %v708
      %v715 = vadd.f32 %v579, 1.0
      %v716 = vlog2.pop %v715
      %v717 = vmul.f32 %v716, 0.6931472
      %v718 = vmul.f32 -0.5, %v579
      %v719 = vadd.f32 %v718, 1.0
      %v720 = vmul.f32 %v719, %v579
      %v721 = vand.u32 2147483647, %v579
      %vm722 = vcmp.lt.f32.partialorder %v721, 0.0004427343
      %v723 = vsel %vm722, %v720, %v717
      %v724 = vadd.f32 %v500, %v588
      %v725 = vadd.f32 %v501, %v597
      %v726 = vadd.f32 %v502, %v606
      %v727 = vadd.f32 %v503, %v615
      %v728 = vadd.f32 %v504, %v624
      %v729 = vadd.f32 %v505, %v633
      %v730 = vadd.f32 %v506, %v642
      %v731 = vadd.f32 %v507, %v651
      %v732 = vadd.f32 %v508, %v660
      %v733 = vadd.f32 %v509, %v669
      %v734 = vadd.f32 %v510, %v678
      %v735 = vadd.f32 %v511, %v687
      %v736 = vadd.f32 %v512, %v696
      %v737 = vadd.f32 %v513, %v705
      %v738 = vadd.f32 %v514, %v714
      %v739 = vadd.f32 %v515, %v723
      %v740 = vld [vmem:[%s3] sm:$0xff]
      %v741 = vld [vmem:[%s3 + $0x8] sm:$0xff]
      %v742 = vld [vmem:[%s3 + $0x10] sm:$0xff]
      %v743 = vld [vmem:[%s3 + $0x18] sm:$0xff]
      %v744 = vld [vmem:[%s3 + $0x20] sm:$0xff]
      %v745 = vld [vmem:[%s3 + $0x28] sm:$0xff]
      %v746 = vld [vmem:[%s3 + $0x30] sm:$0xff]
      %v747 = vld [vmem:[%s3 + $0x38] sm:$0xff]
      %v748 = vld [vmem:[%s3 + $0x40] sm:$0xff]
      %v749 = vld [vmem:[%s3 + $0x48] sm:$0xff]
      %v750 = vld [vmem:[%s3 + $0x50] sm:$0xff]
      %v751 = vld [vmem:[%s3 + $0x58] sm:$0xff]
      %v752 = vld [vmem:[%s3 + $0x60] sm:$0xff]
      %v753 = vld [vmem:[%s3 + $0x68] sm:$0xff]
      %v754 = vld [vmem:[%s3 + $0x70] sm:$0xff]
      %v755 = vld [vmem:[%s3 + $0x78] sm:$0xff]
      %v756 = vld [vmem:[%s4] sm:$0x1]
      %v758 = vlaneseq
      %v759 = vshrl.u32 %v758, 7
      %v760 = vsub.s32 0, %v759
      %v761 = vrot.slane %v756, %v760
      %763 = vmatprep.subr.mxu0 0.0
      %764 = vmatpush1.msra.mxu0 %v740
      %765 = vmatprep.subr.mxu0 0.0
      %766 = vmatpush1.msra.mxu0 %v741
      %767 = vmatprep.subr.mxu0 0.0
      %768 = vmatpush1.msra.mxu0 %v742
      %769 = vmatprep.subr.mxu0 0.0
      %770 = vmatpush1.msra.mxu0 %v743
      %771 = vmatprep.subr.mxu0 0.0
      %772 = vmatpush1.msra.mxu0 %v744
      %773 = vmatprep.subr.mxu0 0.0
      %774 = vmatpush1.msra.mxu0 %v745
      %775 = vmatprep.subr.mxu0 0.0
      %776 = vmatpush1.msra.mxu0 %v746
      %777 = vmatprep.subr.mxu0 0.0
      %778 = vmatpush1.msra.mxu0 %v747
      %779 = vmatprep.subr.mxu0 0.0
      %780 = vmatpush1.msra.mxu0 %v748
      %781 = vmatprep.subr.mxu0 0.0
      %782 = vmatpush1.msra.mxu0 %v749
      %783 = vmatprep.subr.mxu0 0.0
      %784 = vmatpush1.msra.mxu0 %v750
      %785 = vmatprep.subr.mxu0 0.0
      %786 = vmatpush1.msra.mxu0 %v751
      %787 = vmatprep.subr.mxu0 0.0
      %788 = vmatpush1.msra.mxu0 %v752
      %789 = vmatprep.subr.mxu0 0.0
      %790 = vmatpush1.msra.mxu0 %v753
      %791 = vmatprep.subr.mxu0 0.0
      %792 = vmatpush1.msra.mxu0 %v754
      %793 = vmatprep.subr.mxu0 0.0
      %794 = vmatpush1.msra.mxu0 %v755
      %795 = vmatprep.subr.mxu0 0.0
      %796 = vmatpush1.msra.mxu0 0.0
      %797 = vmatprep.subr.mxu0 0.0
      %798 = vmatpush1.msra.mxu0 0.0
      %799 = vmatprep.subr.mxu0 0.0
      %800 = vmatpush1.msra.mxu0 0.0
      %801 = vmatprep.subr.mxu0 0.0
      %802 = vmatpush1.msra.mxu0 0.0
      %803 = vmatprep.subr.mxu0 0.0
      %804 = vmatpush1.msra.mxu0 0.0
      %805 = vmatprep.subr.mxu0 0.0
      %806 = vmatpush1.msra.mxu0 0.0
      %807 = vmatprep.subr.mxu0 0.0
      %808 = vmatpush1.msra.mxu0 0.0
      %809 = vmatprep.subr.mxu0 0.0
      %810 = vmatpush1.msra.mxu0 0.0
      %811 = vmatprep.subr.mxu0 0.0
      %812 = vmatpush1.msra.mxu0 0.0
      %813 = vmatprep.subr.mxu0 0.0
      %814 = vmatpush1.msra.mxu0 0.0
      %815 = vmatprep.subr.mxu0 0.0
      %816 = vmatpush1.msra.mxu0 0.0
      %817 = vmatprep.subr.mxu0 0.0
      %818 = vmatpush1.msra.mxu0 0.0
      %819 = vmatprep.subr.mxu0 0.0
      %820 = vmatpush1.msra.mxu0 0.0
      %821 = vmatprep.subr.mxu0 0.0
      %822 = vmatpush1.msra.mxu0 0.0
      %823 = vmatprep.subr.mxu0 0.0
      %824 = vmatpush1.msra.mxu0 0.0
      %825 = vmatprep.subr.mxu0 0.0
      %826 = vmatpush1.msra.mxu0 0.0
      %827 = vmatprep.mubr.f32.mxu0 0.0
      %828 = vmatmul.mubr.f32.gmra.mrb[0].mxu0 %v724
      %v829 = vpop.f32.mrb[0].mxu0
      %v830 = vadd.f32 %v761, %v829
      %v831 = vpop.f32.mrb[0].mxu0
      %832 = vmatprep.mubr.f32.mxu0 0.0
      %833 = vmatmul.mubr.f32.gmra.mrb[0].mxu0 %v725
      %v834 = vpop.f32.mrb[0].mxu0
      %v835 = vadd.f32 %v761, %v834
      %v836 = vpop.f32.mrb[0].mxu0
      %837 = vmatprep.mubr.f32.mxu0 0.0
      %838 = vmatmul.mubr.f32.gmra.mrb[0].mxu0 %v726
      %v839 = vpop.f32.mrb[0].mxu0
      %v840 = vadd.f32 %v761, %v839
      %v841 = vpop.f32.mrb[0].mxu0
      %842 = vmatprep.mubr.f32.mxu0 0.0
      %843 = vmatmul.mubr.f32.gmra.mrb[0].mxu0 %v727
      %v844 = vpop.f32.mrb[0].mxu0
      %v845 = vadd.f32 %v761, %v844
      %v846 = vpop.f32.mrb[0].mxu0
      %847 = vmatprep.mubr.f32.mxu0 0.0
      %848 = vmatmul.mubr.f32.gmra.mrb[0].mxu0 %v728
      %v849 = vpop.f32.mrb[0].mxu0
      %v850 = vadd.f32 %v761, %v849
      %v851 = vpop.f32.mrb[0].mxu0
      %852 = vmatprep.mubr.f32.mxu0 0.0
      %853 = vmatmul.mubr.f32.gmra.mrb[0].mxu0 %v729
      %v854 = vpop.f32.mrb[0].mxu0
      %v855 = vadd.f32 %v761, %v854
      %v856 = vpop.f32.mrb[0].mxu0
      %857 = vmatprep.mubr.f32.mxu0 0.0
      %858 = vmatmul.mubr.f32.gmra.mrb[0].mxu0 %v730
      %v859 = vpop.f32.mrb[0].mxu0
      %v860 = vadd.f32 %v761, %v859
      %v861 = vpop.f32.mrb[0].mxu0
      %862 = vmatprep.mubr.f32.mxu0 0.0
      %863 = vmatmul.mubr.f32.gmra.mrb[0].mxu0 %v731
      %v864 = vpop.f32.mrb[0].mxu0
      %v865 = vadd.f32 %v761, %v864
      %v866 = vpop.f32.mrb[0].mxu0
      %867 = vmatprep.mubr.f32.mxu0 0.0
      %868 = vmatmul.mubr.f32.gmra.mrb[0].mxu0 %v732
      %v869 = vpop.f32.mrb[0].mxu0
      %v870 = vadd.f32 %v761, %v869
      %v871 = vpop.f32.mrb[0].mxu0
      %872 = vmatprep.mubr.f32.mxu0 0.0
      %873 = vmatmul.mubr.f32.gmra.mrb[0].mxu0 %v733
      %v874 = vpop.f32.mrb[0].mxu0
      %v875 = vadd.f32 %v761, %v874
      %v876 = vpop.f32.mrb[0].mxu0
      %877 = vmatprep.mubr.f32.mxu0 0.0
      %878 = vmatmul.mubr.f32.gmra.mrb[0].mxu0 %v734
      %v879 = vpop.f32.mrb[0].mxu0
      %v880 = vadd.f32 %v761, %v879
      %v881 = vpop.f32.mrb[0].mxu0
      %882 = vmatprep.mubr.f32.mxu0 0.0
      %883 = vmatmul.mubr.f32.gmra.mrb[0].mxu0 %v735
      %v884 = vpop.f32.mrb[0].mxu0
      %v885 = vadd.f32 %v761, %v884
      %v886 = vpop.f32.mrb[0].mxu0
      %887 = vmatprep.mubr.f32.mxu0 0.0
      %888 = vmatmul.mubr.f32.gmra.mrb[0].mxu0 %v736
      %v889 = vpop.f32.mrb[0].mxu0
      %v890 = vadd.f32 %v761, %v889
      %v891 = vpop.f32.mrb[0].mxu0
      %892 = vmatprep.mubr.f32.mxu0 0.0
      %893 = vmatmul.mubr.f32.gmra.mrb[0].mxu0 %v737
      %v894 = vpop.f32.mrb[0].mxu0
      %v895 = vadd.f32 %v761, %v894
      %v896 = vpop.f32.mrb[0].mxu0
      %897 = vmatprep.mubr.f32.mxu0 0.0
      %898 = vmatmul.mubr.f32.gmra.mrb[0].mxu0 %v738
      %v899 = vpop.f32.mrb[0].mxu0
      %v900 = vadd.f32 %v761, %v899
      %v901 = vpop.f32.mrb[0].mxu0
      %902 = vmatprep.mubr.f32.mxu0 0.0
      %903 = vmatmul.mubr.f32.gmra.mrb[0].mxu0 %v739
      %v904 = vpop.f32.mrb[0].mxu0
      %v905 = vadd.f32 %v761, %v904
      %v906 = vpop.f32.mrb[0].mxu0
      %907 = vdwg.mxu0
      %v908 = vmax.f32 %v830, 0.0
      %v909 = vmax.f32 %v835, 0.0
      %v910 = vmax.f32 %v840, 0.0
      %v911 = vmax.f32 %v845, 0.0
      %v912 = vmax.f32 %v850, 0.0
      %v913 = vmax.f32 %v855, 0.0
      %v914 = vmax.f32 %v860, 0.0
      %v915 = vmax.f32 %v865, 0.0
      %v916 = vmax.f32 %v870, 0.0
      %v917 = vmax.f32 %v875, 0.0
      %v918 = vmax.f32 %v880, 0.0
      %v919 = vmax.f32 %v885, 0.0
      %v920 = vmax.f32 %v890, 0.0
      %v921 = vmax.f32 %v895, 0.0
      %v922 = vmax.f32 %v900, 0.0
      %v923 = vmax.f32 %v905, 0.0
      %v924 = vand.u32 2147483647, %v830
      %v925 = vand.u32 2147483647, %v835
      %v926 = vand.u32 2147483647, %v840
      %v927 = vand.u32 2147483647, %v845
      %v928 = vand.u32 2147483647, %v850
      %v929 = vand.u32 2147483647, %v855
      %v930 = vand.u32 2147483647, %v860
      %v931 = vand.u32 2147483647, %v865
      %v932 = vand.u32 2147483647, %v870
      %v933 = vand.u32 2147483647, %v875
      %v934 = vand.u32 2147483647, %v880
      %v935 = vand.u32 2147483647, %v885
      %v936 = vand.u32 2147483647, %v890
      %v937 = vand.u32 2147483647, %v895
      %v938 = vand.u32 2147483647, %v900
      %v939 = vand.u32 2147483647, %v905
      %v940 = vsub.f32 0.0, %v924
      %v941 = vsub.f32 0.0, %v925
      %v942 = vsub.f32 0.0, %v926
      %v943 = vsub.f32 0.0, %v927
      %v944 = vsub.f32 0.0, %v928
      %v945 = vsub.f32 0.0, %v929
      %v946 = vsub.f32 0.0, %v930
      %v947 = vsub.f32 0.0, %v931
      %v948 = vsub.f32 0.0, %v932
      %v949 = vsub.f32 0.0, %v933
      %v950 = vsub.f32 0.0, %v934
      %v951 = vsub.f32 0.0, %v935
      %v952 = vsub.f32 0.0, %v936
      %v953 = vsub.f32 0.0, %v937
      %v954 = vsub.f32 0.0, %v938
      %v955 = vsub.f32 0.0, %v939
      %v956 = vmul.f32 %v940, 1.442695
      %v957 = vpow.pop %v956
      %v958 = vmul.f32 %v941, 1.442695
      %v959 = vpow.pop %v958
      %v960 = vmul.f32 %v942, 1.442695
      %v961 = vpow.pop %v960
      %v962 = vmul.f32 %v943, 1.442695
      %v963 = vpow.pop %v962
      %v964 = vmul.f32 %v944, 1.442695
      %v965 = vpow.pop %v964
      %v966 = vmul.f32 %v945, 1.442695
      %v967 = vpow.pop %v966
      %v968 = vmul.f32 %v946, 1.442695
      %v969 = vpow.pop %v968
      %v970 = vmul.f32 %v947, 1.442695
      %v971 = vpow.pop %v970
      %v972 = vmul.f32 %v948, 1.442695
      %v973 = vpow.pop %v972
      %v974 = vmul.f32 %v949, 1.442695
      %v975 = vpow.pop %v974
      %v976 = vmul.f32 %v950, 1.442695
      %v977 = vpow.pop %v976
      %v978 = vmul.f32 %v951, 1.442695
      %v979 = vpow.pop %v978
      %v980 = vmul.f32 %v952, 1.442695
      %v981 = vpow.pop %v980
      %v982 = vmul.f32 %v953, 1.442695
      %v983 = vpow.pop %v982
      %v984 = vmul.f32 %v954, 1.442695
      %v985 = vpow.pop %v984
      %v986 = vmul.f32 %v955, 1.442695
      %v987 = vpow.pop %v986
      %v988 = vadd.f32 %v957, 1.0
      %v989 = vlog2.pop %v988
      %v990 = vmul.f32 %v989, 0.6931472
      %v991 = vmul.f32 -0.5, %v957
      %v992 = vadd.f32 %v991, 1.0
      %v993 = vmul.f32 %v992, %v957
      %v994 = vand.u32 2147483647, %v957
      %vm995 = vcmp.lt.f32.partialorder %v994, 0.0004427343
      %v996 = vsel %vm995, %v993, %v990
      %v997 = vadd.f32 %v959, 1.0
      %v998 = vlog2.pop %v997
      %v999 = vmul.f32 %v998, 0.6931472
      %v1000 = vmul.f32 -0.5, %v959
      %v1001 = vadd.f32 %v1000, 1.0
      %v1002 = vmul.f32 %v1001, %v959
      %v1003 = vand.u32 2147483647, %v959
      %vm1004 = vcmp.lt.f32.partialorder %v1003, 0.0004427343
      %v1005 = vsel %vm1004, %v1002, %v999
      %v1006 = vadd.f32 %v961, 1.0
      %v1007 = vlog2.pop %v1006
      %v1008 = vmul.f32 %v1007, 0.6931472
      %v1009 = vmul.f32 -0.5, %v961
      %v1010 = vadd.f32 %v1009, 1.0
      %v1011 = vmul.f32 %v1010, %v961
      %v1012 = vand.u32 2147483647, %v961
      %vm1013 = vcmp.lt.f32.partialorder %v1012, 0.0004427343
      %v1014 = vsel %vm1013, %v1011, %v1008
      %v1015 = vadd.f32 %v963, 1.0
      %v1016 = vlog2.pop %v1015
      %v1017 = vmul.f32 %v1016, 0.6931472
      %v1018 = vmul.f32 -0.5, %v963
      %v1019 = vadd.f32 %v1018, 1.0
      %v1020 = vmul.f32 %v1019, %v963
      %v1021 = vand.u32 2147483647, %v963
      %vm1022 = vcmp.lt.f32.partialorder %v1021, 0.0004427343
      %v1023 = vsel %vm1022, %v1020, %v1017
      %v1024 = vadd.f32 %v965, 1.0
      %v1025 = vlog2.pop %v1024
      %v1026 = vmul.f32 %v1025, 0.6931472
      %v1027 = vmul.f32 -0.5, %v965
      %v1028 = vadd.f32 %v1027, 1.0
      %v1029 = vmul.f32 %v1028, %v965
      %v1030 = vand.u32 2147483647, %v965
      %vm1031 = vcmp.lt.f32.partialorder %v1030, 0.0004427343
      %v1032 = vsel %vm1031, %v1029, %v1026
      %v1033 = vadd.f32 %v967, 1.0
      %v1034 = vlog2.pop %v1033
      %v1035 = vmul.f32 %v1034, 0.6931472
      %v1036 = vmul.f32 -0.5, %v967
      %v1037 = vadd.f32 %v1036, 1.0
      %v1038 = vmul.f32 %v1037, %v967
      %v1039 = vand.u32 2147483647, %v967
      %vm1040 = vcmp.lt.f32.partialorder %v1039, 0.0004427343
      %v1041 = vsel %vm1040, %v1038, %v1035
      %v1042 = vadd.f32 %v969, 1.0
      %v1043 = vlog2.pop %v1042
      %v1044 = vmul.f32 %v1043, 0.6931472
      %v1045 = vmul.f32 -0.5, %v969
      %v1046 = vadd.f32 %v1045, 1.0
      %v1047 = vmul.f32 %v1046, %v969
      %v1048 = vand.u32 2147483647, %v969
      %vm1049 = vcmp.lt.f32.partialorder %v1048, 0.0004427343
      %v1050 = vsel %vm1049, %v1047, %v1044
      %v1051 = vadd.f32 %v971, 1.0
      %v1052 = vlog2.pop %v1051
      %v1053 = vmul.f32 %v1052, 0.6931472
      %v1054 = vmul.f32 -0.5, %v971
      %v1055 = vadd.f32 %v1054, 1.0
      %v1056 = vmul.f32 %v1055, %v971
      %v1057 = vand.u32 2147483647, %v971
      %vm1058 = vcmp.lt.f32.partialorder %v1057, 0.0004427343
      %v1059 = vsel %vm1058, %v1056, %v1053
      %v1060 = vadd.f32 %v973, 1.0
      %v1061 = vlog2.pop %v1060
      %v1062 = vmul.f32 %v1061, 0.6931472
      %v1063 = vmul.f32 -0.5, %v973
      %v1064 = vadd.f32 %v1063, 1.0
      %v1065 = vmul.f32 %v1064, %v973
      %v1066 = vand.u32 2147483647, %v973
      %vm1067 = vcmp.lt.f32.partialorder %v1066, 0.0004427343
      %v1068 = vsel %vm1067, %v1065, %v1062
      %v1069 = vadd.f32 %v975, 1.0
      %v1070 = vlog2.pop %v1069
      %v1071 = vmul.f32 %v1070, 0.6931472
      %v1072 = vmul.f32 -0.5, %v975
      %v1073 = vadd.f32 %v1072, 1.0
      %v1074 = vmul.f32 %v1073, %v975
      %v1075 = vand.u32 2147483647, %v975
      %vm1076 = vcmp.lt.f32.partialorder %v1075, 0.0004427343
      %v1077 = vsel %vm1076, %v1074, %v1071
      %v1078 = vadd.f32 %v977, 1.0
      %v1079 = vlog2.pop %v1078
      %v1080 = vmul.f32 %v1079, 0.6931472
      %v1081 = vmul.f32 -0.5, %v977
      %v1082 = vadd.f32 %v1081, 1.0
      %v1083 = vmul.f32 %v1082, %v977
      %v1084 = vand.u32 2147483647, %v977
      %vm1085 = vcmp.lt.f32.partialorder %v1084, 0.0004427343
      %v1086 = vsel %vm1085, %v1083, %v1080
      %v1087 = vadd.f32 %v979, 1.0
      %v1088 = vlog2.pop %v1087
      %v1089 = vmul.f32 %v1088, 0.6931472
      %v1090 = vmul.f32 -0.5, %v979
      %v1091 = vadd.f32 %v1090, 1.0
      %v1092 = vmul.f32 %v1091, %v979
      %v1093 = vand.u32 2147483647, %v979
      %vm1094 = vcmp.lt.f32.partialorder %v1093, 0.0004427343
      %v1095 = vsel %vm1094, %v1092, %v1089
      %v1096 = vadd.f32 %v981, 1.0
      %v1097 = vlog2.pop %v1096
      %v1098 = vmul.f32 %v1097, 0.6931472
      %v1099 = vmul.f32 -0.5, %v981
      %v1100 = vadd.f32 %v1099, 1.0
      %v1101 = vmul.f32 %v1100, %v981
      %v1102 = vand.u32 2147483647, %v981
      %vm1103 = vcmp.lt.f32.partialorder %v1102, 0.0004427343
      %v1104 = vsel %vm1103, %v1101, %v1098
      %v1105 = vadd.f32 %v983, 1.0
      %v1106 = vlog2.pop %v1105
      %v1107 = vmul.f32 %v1106, 0.6931472
      %v1108 = vmul.f32 -0.5, %v983
      %v1109 = vadd.f32 %v1108, 1.0
      %v1110 = vmul.f32 %v1109, %v983
      %v1111 = vand.u32 2147483647, %v983
      %vm1112 = vcmp.lt.f32.partialorder %v1111, 0.0004427343
      %v1113 = vsel %vm1112, %v1110, %v1107
      %v1114 = vadd.f32 %v985, 1.0
      %v1115 = vlog2.pop %v1114
      %v1116 = vmul.f32 %v1115, 0.6931472
      %v1117 = vmul.f32 -0.5, %v985
      %v1118 = vadd.f32 %v1117, 1.0
      %v1119 = vmul.f32 %v1118, %v985
      %v1120 = vand.u32 2147483647, %v985
      %vm1121 = vcmp.lt.f32.partialorder %v1120, 0.0004427343
      %v1122 = vsel %vm1121, %v1119, %v1116
      %v1123 = vadd.f32 %v987, 1.0
      %v1124 = vlog2.pop %v1123
      %v1125 = vmul.f32 %v1124, 0.6931472
      %v1126 = vmul.f32 -0.5, %v987
      %v1127 = vadd.f32 %v1126, 1.0
      %v1128 = vmul.f32 %v1127, %v987
      %v1129 = vand.u32 2147483647, %v987
      %vm1130 = vcmp.lt.f32.partialorder %v1129, 0.0004427343
      %v1131 = vsel %vm1130, %v1128, %v1125
      %v1132 = vadd.f32 %v908, %v996
      %v1133 = vadd.f32 %v909, %v1005
      %v1134 = vadd.f32 %v910, %v1014
      %v1135 = vadd.f32 %v911, %v1023
      %v1136 = vadd.f32 %v912, %v1032
      %v1137 = vadd.f32 %v913, %v1041
      %v1138 = vadd.f32 %v914, %v1050
      %v1139 = vadd.f32 %v915, %v1059
      %v1140 = vadd.f32 %v916, %v1068
      %v1141 = vadd.f32 %v917, %v1077
      %v1142 = vadd.f32 %v918, %v1086
      %v1143 = vadd.f32 %v919, %v1095
      %v1144 = vadd.f32 %v920, %v1104
      %v1145 = vadd.f32 %v921, %v1113
      %v1146 = vadd.f32 %v922, %v1122
      %v1147 = vadd.f32 %v923, %v1131
      %v1148 = vld [vmem:[%s5] sm:$0xff]
      %v1149 = vld [vmem:[%s5 + $0x8] sm:$0xff]
      %v1150 = vld [vmem:[%s5 + $0x10] sm:$0xff]
      %v1151 = vld [vmem:[%s5 + $0x18] sm:$0xff]
      %v1152 = vld [vmem:[%s5 + $0x20] sm:$0xff]
      %v1153 = vld [vmem:[%s5 + $0x28] sm:$0xff]
      %v1154 = vld [vmem:[%s5 + $0x30] sm:$0xff]
      %v1155 = vld [vmem:[%s5 + $0x38] sm:$0xff]
      %v1156 = vld [vmem:[%s5 + $0x40] sm:$0xff]
      %v1157 = vld [vmem:[%s5 + $0x48] sm:$0xff]
      %v1158 = vld [vmem:[%s5 + $0x50] sm:$0xff]
      %v1159 = vld [vmem:[%s5 + $0x58] sm:$0xff]
      %v1160 = vld [vmem:[%s5 + $0x60] sm:$0xff]
      %v1161 = vld [vmem:[%s5 + $0x68] sm:$0xff]
      %v1162 = vld [vmem:[%s5 + $0x70] sm:$0xff]
      %v1163 = vld [vmem:[%s5 + $0x78] sm:$0xff]
      %v1164 = vld [vmem:[%s6] sm:$0x1]
      %v1166 = vlaneseq
      %v1167 = vshrl.u32 %v1166, 7
      %v1168 = vsub.s32 0, %v1167
      %v1169 = vrot.slane %v1164, %v1168
      %1171 = vmatprep.subr.mxu0 0.0
      %1172 = vmatpush1.msra.mxu0 %v1148
      %1173 = vmatprep.subr.mxu0 0.0
      %1174 = vmatpush1.msra.mxu0 %v1149
      %1175 = vmatprep.subr.mxu0 0.0
      %1176 = vmatpush1.msra.mxu0 %v1150
      %1177 = vmatprep.subr.mxu0 0.0
      %1178 = vmatpush1.msra.mxu0 %v1151
      %1179 = vmatprep.subr.mxu0 0.0
      %1180 = vmatpush1.msra.mxu0 %v1152
      %1181 = vmatprep.subr.mxu0 0.0
      %1182 = vmatpush1.msra.mxu0 %v1153
      %1183 = vmatprep.subr.mxu0 0.0
      %1184 = vmatpush1.msra.mxu0 %v1154
      %1185 = vmatprep.subr.mxu0 0.0
      %1186 = vmatpush1.msra.mxu0 %v1155
      %1187 = vmatprep.subr.mxu0 0.0
      %1188 = vmatpush1.msra.mxu0 %v1156
      %1189 = vmatprep.subr.mxu0 0.0
      %1190 = vmatpush1.msra.mxu0 %v1157
      %1191 = vmatprep.subr.mxu0 0.0
      %1192 = vmatpush1.msra.mxu0 %v1158
      %1193 = vmatprep.subr.mxu0 0.0
      %1194 = vmatpush1.msra.mxu0 %v1159
      %1195 = vmatprep.subr.mxu0 0.0
      %1196 = vmatpush1.msra.mxu0 %v1160
      %1197 = vmatprep.subr.mxu0 0.0
      %1198 = vmatpush1.msra.mxu0 %v1161
      %1199 = vmatprep.subr.mxu0 0.0
      %1200 = vmatpush1.msra.mxu0 %v1162
      %1201 = vmatprep.subr.mxu0 0.0
      %1202 = vmatpush1.msra.mxu0 %v1163
      %1203 = vmatprep.subr.mxu0 0.0
      %1204 = vmatpush1.msra.mxu0 0.0
      %1205 = vmatprep.subr.mxu0 0.0
      %1206 = vmatpush1.msra.mxu0 0.0
      %1207 = vmatprep.subr.mxu0 0.0
      %1208 = vmatpush1.msra.mxu0 0.0
      %1209 = vmatprep.subr.mxu0 0.0
      %1210 = vmatpush1.msra.mxu0 0.0
      %1211 = vmatprep.subr.mxu0 0.0
      %1212 = vmatpush1.msra.mxu0 0.0
      %1213 = vmatprep.subr.mxu0 0.0
      %1214 = vmatpush1.msra.mxu0 0.0
      %1215 = vmatprep.subr.mxu0 0.0
      %1216 = vmatpush1.msra.mxu0 0.0
      %1217 = vmatprep.subr.mxu0 0.0
      %1218 = vmatpush1.msra.mxu0 0.0
      %1219 = vmatprep.subr.mxu0 0.0
      %1220 = vmatpush1.msra.mxu0 0.0
      %1221 = vmatprep.subr.mxu0 0.0
      %1222 = vmatpush1.msra.mxu0 0.0
      %1223 = vmatprep.subr.mxu0 0.0
      %1224 = vmatpush1.msra.mxu0 0.0
      %1225 = vmatprep.subr.mxu0 0.0
      %1226 = vmatpush1.msra.mxu0 0.0
      %1227 = vmatprep.subr.mxu0 0.0
      %1228 = vmatpush1.msra.mxu0 0.0
      %1229 = vmatprep.subr.mxu0 0.0
      %1230 = vmatpush1.msra.mxu0 0.0
      %1231 = vmatprep.subr.mxu0 0.0
      %1232 = vmatpush1.msra.mxu0 0.0
      %1233 = vmatprep.subr.mxu0 0.0
      %1234 = vmatpush1.msra.mxu0 0.0
      %1235 = vmatprep.mubr.f32.mxu0 0.0
      %1236 = vmatmul.mubr.f32.gmra.mrb[0].mxu0 %v1132
      %v1237 = vpop.f32.mrb[0].mxu0
      %v1238 = vadd.f32 %v1169, %v1237
      %v1239 = vpop.f32.mrb[0].mxu0
      %1240 = vmatprep.mubr.f32.mxu0 0.0
      %1241 = vmatmul.mubr.f32.gmra.mrb[0].mxu0 %v1133
      %v1242 = vpop.f32.mrb[0].mxu0
      %v1243 = vadd.f32 %v1169, %v1242
      %v1244 = vpop.f32.mrb[0].mxu0
      %1245 = vmatprep.mubr.f32.mxu0 0.0
      %1246 = vmatmul.mubr.f32.gmra.mrb[0].mxu0 %v1134
      %v1247 = vpop.f32.mrb[0].mxu0
      %v1248 = vadd.f32 %v1169, %v1247
      %v1249 = vpop.f32.mrb[0].mxu0
      %1250 = vmatprep.mubr.f32.mxu0 0.0
      %1251 = vmatmul.mubr.f32.gmra.mrb[0].mxu0 %v1135
      %v1252 = vpop.f32.mrb[0].mxu0
      %v1253 = vadd.f32 %v1169, %v1252
      %v1254 = vpop.f32.mrb[0].mxu0
      %1255 = vmatprep.mubr.f32.mxu0 0.0
      %1256 = vmatmul.mubr.f32.gmra.mrb[0].mxu0 %v1136
      %v1257 = vpop.f32.mrb[0].mxu0
      %v1258 = vadd.f32 %v1169, %v1257
      %v1259 = vpop.f32.mrb[0].mxu0
      %1260 = vmatprep.mubr.f32.mxu0 0.0
      %1261 = vmatmul.mubr.f32.gmra.mrb[0].mxu0 %v1137
      %v1262 = vpop.f32.mrb[0].mxu0
      %v1263 = vadd.f32 %v1169, %v1262
      %v1264 = vpop.f32.mrb[0].mxu0
      %1265 = vmatprep.mubr.f32.mxu0 0.0
      %1266 = vmatmul.mubr.f32.gmra.mrb[0].mxu0 %v1138
      %v1267 = vpop.f32.mrb[0].mxu0
      %v1268 = vadd.f32 %v1169, %v1267
      %v1269 = vpop.f32.mrb[0].mxu0
      %1270 = vmatprep.mubr.f32.mxu0 0.0
      %1271 = vmatmul.mubr.f32.gmra.mrb[0].mxu0 %v1139
      %v1272 = vpop.f32.mrb[0].mxu0
      %v1273 = vadd.f32 %v1169, %v1272
      %v1274 = vpop.f32.mrb[0].mxu0
      %1275 = vmatprep.mubr.f32.mxu0 0.0
      %1276 = vmatmul.mubr.f32.gmra.mrb[0].mxu0 %v1140
      %v1277 = vpop.f32.mrb[0].mxu0
      %v1278 = vadd.f32 %v1169, %v1277
      %v1279 = vpop.f32.mrb[0].mxu0
      %1280 = vmatprep.mubr.f32.mxu0 0.0
      %1281 = vmatmul.mubr.f32.gmra.mrb[0].mxu0 %v1141
      %v1282 = vpop.f32.mrb[0].mxu0
      %v1283 = vadd.f32 %v1169, %v1282
      %v1284 = vpop.f32.mrb[0].mxu0
      %1285 = vmatprep.mubr.f32.mxu0 0.0
      %1286 = vmatmul.mubr.f32.gmra.mrb[0].mxu0 %v1142
      %v1287 = vpop.f32.mrb[0].mxu0
      %v1288 = vadd.f32 %v1169, %v1287
      %v1289 = vpop.f32.mrb[0].mxu0
      %1290 = vmatprep.mubr.f32.mxu0 0.0
      %1291 = vmatmul.mubr.f32.gmra.mrb[0].mxu0 %v1143
      %v1292 = vpop.f32.mrb[0].mxu0
      %v1293 = vadd.f32 %v1169, %v1292
      %v1294 = vpop.f32.mrb[0].mxu0
      %1295 = vmatprep.mubr.f32.mxu0 0.0
      %1296 = vmatmul.mubr.f32.gmra.mrb[0].mxu0 %v1144
      %v1297 = vpop.f32.mrb[0].mxu0
      %v1298 = vadd.f32 %v1169, %v1297
      %v1299 = vpop.f32.mrb[0].mxu0
      %1300 = vmatprep.mubr.f32.mxu0 0.0
      %1301 = vmatmul.mubr.f32.gmra.mrb[0].mxu0 %v1145
      %v1302 = vpop.f32.mrb[0].mxu0
      %v1303 = vadd.f32 %v1169, %v1302
      %v1304 = vpop.f32.mrb[0].mxu0
      %1305 = vmatprep.mubr.f32.mxu0 0.0
      %1306 = vmatmul.mubr.f32.gmra.mrb[0].mxu0 %v1146
      %v1307 = vpop.f32.mrb[0].mxu0
      %v1308 = vadd.f32 %v1169, %v1307
      %v1309 = vpop.f32.mrb[0].mxu0
      %1310 = vmatprep.mubr.f32.mxu0 0.0
      %1311 = vmatmul.mubr.f32.gmra.mrb[0].mxu0 %v1147
      %v1312 = vpop.f32.mrb[0].mxu0
      %v1313 = vadd.f32 %v1169, %v1312
      %v1314 = vpop.f32.mrb[0].mxu0
      %1315 = vdwg.mxu0
      %vm1316 = vcmask 31744
      %1317 = vst.msk [vmem:[%s280] sm:$0xff] %vm1316, %v1238
      %1318 = vst.msk [vmem:[%s280 + $0x8] sm:$0xff] %vm1316, %v1243
      %1319 = vst.msk [vmem:[%s280 + $0x10] sm:$0xff] %vm1316, %v1248
      %1320 = vst.msk [vmem:[%s280 + $0x18] sm:$0xff] %vm1316, %v1253
      %1321 = vst.msk [vmem:[%s280 + $0x20] sm:$0xff] %vm1316, %v1258
      %1322 = vst.msk [vmem:[%s280 + $0x28] sm:$0xff] %vm1316, %v1263
      %1323 = vst.msk [vmem:[%s280 + $0x30] sm:$0xff] %vm1316, %v1268
      %1324 = vst.msk [vmem:[%s280 + $0x38] sm:$0xff] %vm1316, %v1273
      %1325 = vst.msk [vmem:[%s280 + $0x40] sm:$0xff] %vm1316, %v1278
      %1326 = vst.msk [vmem:[%s280 + $0x48] sm:$0xff] %vm1316, %v1283
      %1327 = vst.msk [vmem:[%s280 + $0x50] sm:$0xff] %vm1316, %v1288
      %1328 = vst.msk [vmem:[%s280 + $0x58] sm:$0xff] %vm1316, %v1293
      %1329 = vst.msk [vmem:[%s280 + $0x60] sm:$0xff] %vm1316, %v1298
      %1330 = vst.msk [vmem:[%s280 + $0x68] sm:$0xff] %vm1316, %v1303
      %1331 = vst.msk [vmem:[%s280 + $0x70] sm:$0xff] %vm1316, %v1308
      %1332 = vst.msk [vmem:[%s280 + $0x78] sm:$0xff] %vm1316, %v1313
      %s1333 = smul.u32 16, %s18
      %p1334 = scmp.lt.s32.totalorder %s1333, 31
      %s1335 = scalar_select %p1334, %s1333, 31
      %s1336 = smul.addr %s1335, 8
      %s1337 = scalar_lea.vmem %s7, %s1336
      // Predicated region
      $region49: #{tpu_custom_call.1} parent=47 // pred_check
        %p1338 = pneg %p188
      $region50: #{tpu_custom_call.1} parent=47 // pred_check_branch
        %1340 = sbr.rel (%p1338) target = $region52
      $region51: #{tpu_custom_call.1} parent=47 // pred_region
        %s1341 = smul.u32 16, %s18
      $region52: #{tpu_custom_call.1} parent=47 // pred_fallthru
        _
    $region48: #{tpu_custom_call.1} parent=5 // pred_fallthru
      _
    %p1342 = scmp.le.s32.totalorder 2, %s13
    // Predicated region
    $region53: #{tpu_custom_call.1} parent=5 // pred_check
      %p1343 = pneg %p1342
    $region54: #{tpu_custom_call.1} parent=5 // pred_check_branch
      %1345 = sbr.rel (%p1343) target = $region56
    $region55: #{tpu_custom_call.1} parent=5 // pred_region
      %s1346 = ssub.s32 %s13, 2
      // Predicated region
      $region57: #{tpu_custom_call.1} parent=55 // pred_check
        %p1347 = pneg %p194
      $region58: #{tpu_custom_call.1} parent=55 // pred_check_branch
        %1349 = sbr.rel (%p1347) target = $region60
      $region59: #{tpu_custom_call.1} parent=55 // pred_region
        %s1350 = smul.u32 16, %s19
        %p1351 = scmp.lt.s32.totalorder %s1350, 31
        %s1352 = scalar_select %p1351, %s1350, 31
        %s1353 = smul.addr %s1352, 8
        %s1354 = scalar_lea.vmem %s7, %s1353
      $region60: #{tpu_custom_call.1} parent=55 // pred_fallthru
        _
    $region56: #{tpu_custom_call.1} parent=5 // pred_fallthru
      _
  $region6: #{tpu_custom_call.1} parent=0 // loop_footer
    %s17 = sadd.s32 1, %s13
  $region7: #{tpu_custom_call.1} parent=0 // loop_footer_branch
    %12 = sbr.rel target = $region3
  $region8: #{tpu_custom_call.1} parent=0 // loop_exit
    _

</llo_original>
